<compile_context>
chip_gen: v5e
topology: v5e:2x2
jax: 0.10.0
libtpu: 0.0.40
codegen_flags: <defaults>
</compile_context>

<pallas_src>
import functools

import jax
import jax.numpy as jnp
from jax.experimental import pallas as pl
from jax.experimental.pallas import tpu as pltpu

VEC_LEN = 50
IN_FEATURES = 210                 # K
OUT_FEATURES = 5 * VEC_LEN        # N = 250

_SUBLANE = 8


def _round_up(x, m):
    return ((x + m - 1) // m) * m


def _linear_kernel(x_ref, w_ref, b_ref, o_ref):
    # x_ref: (tb, 210), w_ref: (210, 250), b_ref: (1, 250), o_ref: (tb, 250)
    acc = jnp.dot(x_ref[...], w_ref[...], preferred_element_type=jnp.float32)
    o_ref[...] = (acc + b_ref[...]).astype(o_ref.dtype)


def prepare_params(weight, bias):
    """One-time param prep (hoisted out of the per-call path).

    weight: (250, 210) f32 in PyTorch nn.Linear layout -> returns (210, 250)
    bias:   (250,)    f32                              -> returns (1, 250)
    """
    return jnp.asarray(weight).T, jnp.asarray(bias).reshape(1, -1)


@functools.partial(jax.jit, static_argnames=("block_b",))
def nnpolicy_forward(x, w_t, b_2d, *, block_b=2048):
    """Forward of NNPolicy: y = x @ w_t + b_2d.

    x:    (B, 210) f32
    w_t:  (210, 250) f32   (pre-transposed weight from prepare_params)
    b_2d: (1, 250)  f32
    returns (B, 250) f32
    """
    B, K = x.shape
    N = w_t.shape[1]

    # Batch tile: cap at block_b, but split into >=2 tiles when possible so both
    # TensorCores on v7x get work. Last block may be ragged (masked on store).
    if B <= _SUBLANE:
        tb = B                                         # block == full batch dim: legal
    else:
        tb = min(block_b, _round_up(pl.cdiv(B, 2), _SUBLANE))
    grid_b = pl.cdiv(B, tb)

    cost = pl.CostEstimate(
        flops=2 * B * K * N,
        bytes_accessed=B * (K + N) * 4 + K * N * 4 + N * 4,
        transcendentals=0,
    )

    out = pl.pallas_call(
        _linear_kernel,
        out_shape=jax.ShapeDtypeStruct((B, N), x.dtype),
        grid_spec=pltpu.PrefetchScalarGridSpec(
            num_scalar_prefetch=0,
            grid=(grid_b,),
            in_specs=[
                pl.BlockSpec((tb, K), lambda i: (i, 0)),   # x: tiled over batch, full K
                pl.BlockSpec((K, N), lambda i: (0, 0)),    # weight: resident, unpadded
                pl.BlockSpec((1, N), lambda i: (0, 0)),    # bias: resident
            ],
            out_specs=pl.BlockSpec((tb, N), lambda i: (i, 0)),
        ),
        compiler_params=pltpu.CompilerParams(
            # Batch tiles are independent -> shard across TensorCores on v7x.
            dimension_semantics=("parallel",),
        ),
        cost_estimate=cost,
    )(x, w_t, b_2d)

    return out


if __name__ == "__main__":
    key = jax.random.PRNGKey(0)
    kx, kw, kb = jax.random.split(key, 3)

    batch = 8
    x = jax.random.normal(kx, (batch, IN_FEATURES), dtype=jnp.float32)

    # Deterministic params mirroring nn.Linear's uniform(-1/sqrt(fan_in), 1/sqrt(fan_in)).
    bound = 1.0 / jnp.sqrt(jnp.float32(IN_FEATURES))
    weight = jax.random.uniform(
        kw, (OUT_FEATURES, IN_FEATURES), dtype=jnp.float32, minval=-bound, maxval=bound
    )
    bias = jax.random.uniform(
        kb, (OUT_FEATURES,), dtype=jnp.float32, minval=-bound, maxval=bound
    )

    # One-time param prep (transpose + reshape hoisted out of the forward path).
    w_t, b_2d = prepare_params(weight, bias)

    out = nnpolicy_forward(x, w_t, b_2d)
    out = jax.block_until_ready(out)

    # Cross-check against the plain-JAX reference of the PyTorch forward.
    ref = x @ weight.T + bias
    assert out.shape == (batch, OUT_FEATURES), out.shape
    assert jnp.allclose(out, ref, atol=1e-5, rtol=1e-5)

    print("KERNEL_OK")
</pallas_src>

<mosaic_0001>
module attributes {stable_mosaic.version = 11 : i64} {
  func.func @_linear_kernel(%arg0: i32, %arg1: memref<8x210xf32, #tpu.memory_space<vmem>>, %arg2: memref<210x250xf32, #tpu.memory_space<vmem>>, %arg3: memref<1x250xf32, #tpu.memory_space<vmem>>, %arg4: memref<8x250xf32, #tpu.memory_space<vmem>>) attributes {dimension_semantics = [#tpu.dimension_semantics<parallel>], iteration_bounds = array<i64: 1>, scalar_prefetch = 0 : i64, scratch_operands = 0 : i64, tpu.core_type = #tpu.core_type<tc>, window_params = [{transform_indices = @transform_0, window_bounds = array<i64: 8, 210>}, {pipeline_mode = #tpu.pipeline_mode<synchronous>, transform_indices = @transform_1, window_bounds = array<i64: 210, 250>}, {pipeline_mode = #tpu.pipeline_mode<synchronous>, transform_indices = @transform_2, window_bounds = array<i64: 1, 250>}, {transform_indices = @transform_3, window_bounds = array<i64: 8, 250>}]} {
    %c0 = arith.constant 0 : index
    %c0_0 = arith.constant 0 : index
    %0 = vector.load %arg1[%c0, %c0_0] : memref<8x210xf32, #tpu.memory_space<vmem>>, vector<8x210xf32>
    %c0_1 = arith.constant 0 : index
    %c0_2 = arith.constant 0 : index
    %1 = vector.load %arg2[%c0_1, %c0_2] : memref<210x250xf32, #tpu.memory_space<vmem>>, vector<210x250xf32>
    %cst = arith.constant dense<0.000000e+00> : vector<8x250xf32>
    %2 = tpu.matmul %0, %1, %cst {dimension_numbers = #tpu.dot_dimension_numbers<[1], [0], [0], [1], [0, 0, 1, 1], [], []>} : vector<8x210xf32>, vector<210x250xf32>, vector<8x250xf32> -> vector<8x250xf32>
    %c0_3 = arith.constant 0 : index
    %c0_4 = arith.constant 0 : index
    %3 = vector.load %arg3[%c0_3, %c0_4] : memref<1x250xf32, #tpu.memory_space<vmem>>, vector<1x250xf32>
    %4 = vector.broadcast %3 : vector<1x250xf32> to vector<8x250xf32>
    %5 = arith.addf %2, %4 : vector<8x250xf32>
    %c0_5 = arith.constant 0 : index
    %c0_6 = arith.constant 0 : index
    %6 = vector.load %arg4[%c0_5, %c0_6] : memref<8x250xf32, #tpu.memory_space<vmem>>, vector<8x250xf32>
    tpu.vector_store %arg4[%c0_5, %c0_6], %5 {strides = array<i32>} : memref<8x250xf32, #tpu.memory_space<vmem>>, vector<8x250xf32>,
    return
  }
  func.func @transform_0(%arg0: i32) -> (i32, i32) {
    %c0_i32 = arith.constant 0 : i32
    %c0_i32_0 = arith.constant 0 : i32
    return %arg0, %c0_i32 : i32, i32
  }
  func.func @transform_1(%arg0: i32) -> (i32, i32) {
    %c0_i32 = arith.constant 0 : i32
    %c0_i32_0 = arith.constant 0 : i32
    %c0_i32_1 = arith.constant 0 : i32
    return %c0_i32, %c0_i32_0 : i32, i32
  }
  func.func @transform_2(%arg0: i32) -> (i32, i32) {
    %c0_i32 = arith.constant 0 : i32
    %c0_i32_0 = arith.constant 0 : i32
    %c0_i32_1 = arith.constant 0 : i32
    return %c0_i32, %c0_i32_0 : i32, i32
  }
  func.func @transform_3(%arg0: i32) -> (i32, i32) {
    %c0_i32 = arith.constant 0 : i32
    %c0_i32_0 = arith.constant 0 : i32
    return %arg0, %c0_i32 : i32, i32
  }
}

</mosaic_0001>

<llo_original>
// kernel: nnpolicy_forward.1
$region0: #{nnpolicy_forward.1}
  #allocation0 [shape = 'u32[]', space=smem, size = 0x4, offset = 0x4, fixed_abs, tag = 'smem constant byte address 0x4 - core index']
  #allocation1 [shape = 'u32[72,128]{1,0:T(1,128)}', space=vmem, size = 0x9000, scoped, tag = 'internal scratch']
  %s0 = inlined_call_operand.hbm [shape: f32[8,210], index: 0, kind: input, shape index: {}]
  %s1 = inlined_call_operand.hbm [shape: f32[210,250], index: 1, kind: input, shape index: {}]
  %s2 = inlined_call_operand.hbm [shape: f32[1,250], index: 2, kind: input, shape index: {}]
  %s3 = inlined_call_operand.hbm [shape: f32[8,250], index: 3, kind: output, shape index: {}]
  %s4 = sld [smem:[#allocation0]]
  $region34: #{nnpolicy_forward.1} parent=0
    _
  %s6 = ssub.s32 1, %s4
  %s7 = scalar_select 0, %s6, %s4
  $region1: #{nnpolicy_forward.1} parent=0
    #allocation2 [shape = 'u8[8192]{0}', space=vmem, size = 0x2000, scoped, tag = 'input window, operand 0, single buffered']
    #allocation3 [shape = 's32[1]{0}', space=sflag, size = 0x4, scoped, tag = 'scoped memory for nnpolicy_forward.1']
    #allocation4 [shape = 's32[1]{0}', space=sflag, size = 0x4, scoped, tag = 'scoped memory for nnpolicy_forward.1']
    #allocation5 [shape = 'u8[221184]{0}', space=vmem, size = 0x36000, scoped, tag = 'input window, operand 1, single buffered']
    #allocation6 [shape = 's32[1]{0}', space=sflag, size = 0x4, scoped, tag = 'scoped memory for nnpolicy_forward.1']
    #allocation7 [shape = 'u8[1024]{0}', space=vmem, size = 0x400, scoped, tag = 'input window, operand 2, single buffered']
    #allocation8 [shape = 'u8[8192]{0}', space=vmem, size = 0x2000, scoped, tag = 'output window, operand 0, single buffered']
    %8 = vsyncpa [#allocation3], 0
    %9 = vsyncpa [#allocation6], 0
    %10 = vsyncpa [#allocation4], 0
    // Predicated region
    $region2: #{nnpolicy_forward.1} parent=1 // pred_check
      _
    $region3: #{nnpolicy_forward.1} parent=1 // pred_check_branch
      %12 = sbr.rel (0) target = $region5
    $region4: #{nnpolicy_forward.1} parent=1 // pred_region
      %14 = vsyncadd [#allocation3], 0
      %s16 = sshll.u32 %s0, 4
      %s17 = int_to_ptr.hbm [resolvable:$true] %s16
      %s18 = sshll.u32 [#allocation2], 4
      %s19 = int_to_ptr.vmem [resolvable:$true] %s18
      %21 = dma.hbm_to_vmem [thread:$0]  %s17, 256, %s19, [#allocation3]
    $region5: #{nnpolicy_forward.1} parent=1 // pred_fallthru
      _
    // Predicated region
    $region6: #{nnpolicy_forward.1} parent=1 // pred_check
      _
    $region7: #{nnpolicy_forward.1} parent=1 // pred_check_branch
      %23 = sbr.rel (0) target = $region9
    $region8: #{nnpolicy_forward.1} parent=1 // pred_region
      %25 = vsyncadd [#allocation6], 0
      %s26 = sshll.u32 %s1, 4
      %s27 = int_to_ptr.hbm [resolvable:$true] %s26
      %s28 = sshll.u32 [#allocation5], 4
      %s29 = int_to_ptr.vmem [resolvable:$true] %s28
      %34 = dma.hbm_to_vmem [thread:$0]  %s27, 6912, %s29, [#allocation6], 256, 256, 16
    $region9: #{nnpolicy_forward.1} parent=1 // pred_fallthru
      _
    // Predicated region
    $region10: #{nnpolicy_forward.1} parent=1 // pred_check
      _
    $region11: #{nnpolicy_forward.1} parent=1 // pred_check_branch
      %36 = sbr.rel (0) target = $region13
    $region12: #{nnpolicy_forward.1} parent=1 // pred_region
      %38 = vsyncadd [#allocation6], 0
      %s40 = sshll.u32 %s2, 4
      %s41 = int_to_ptr.hbm [resolvable:$true] %s40
      %s42 = sshll.u32 [#allocation7], 4
      %s43 = int_to_ptr.vmem [resolvable:$true] %s42
      %45 = dma.hbm_to_vmem [thread:$0]  %s41, 32, %s43, [#allocation6]
    $region13: #{nnpolicy_forward.1} parent=1 // pred_fallthru
      _
    // Predicated region
    $region14: #{nnpolicy_forward.1} parent=1 // pred_check
      _
    $region15: #{nnpolicy_forward.1} parent=1 // pred_check_branch
      %47 = sbr.rel (0) target = $region17
    $region16: #{nnpolicy_forward.1} parent=1 // pred_region
      %49 = dma.done [#allocation3], 256
    $region17: #{nnpolicy_forward.1} parent=1 // pred_fallthru
      _
    // Predicated region
    $region18: #{nnpolicy_forward.1} parent=1 // pred_check
      _
    $region19: #{nnpolicy_forward.1} parent=1 // pred_check_branch
      %51 = sbr.rel (0) target = $region21
    $region20: #{nnpolicy_forward.1} parent=1 // pred_region
      %53 = dma.done [#allocation6], 6912
    $region21: #{nnpolicy_forward.1} parent=1 // pred_fallthru
      _
    // Predicated region
    $region22: #{nnpolicy_forward.1} parent=1 // pred_check
      _
    $region23: #{nnpolicy_forward.1} parent=1 // pred_check_branch
      %55 = sbr.rel (0) target = $region25
    $region24: #{nnpolicy_forward.1} parent=1 // pred_region
      %57 = dma.done [#allocation6], 32
    $region25: #{nnpolicy_forward.1} parent=1 // pred_fallthru
      _
    %v58 = vld [vmem:[#allocation2] sm:$0xff]
    %v59 = vld [vmem:[#allocation2 + $0x8] sm:$0xff]
    %v60 = vld [vmem:[#allocation5] sm:$0xff]
    %v61 = vld [vmem:[#allocation5 + $0x8] sm:$0xff]
    %v62 = vld [vmem:[#allocation5 + $0x10] sm:$0xff]
    %v63 = vld [vmem:[#allocation5 + $0x18] sm:$0xff]
    %v64 = vld [vmem:[#allocation5 + $0x20] sm:$0xff]
    %v65 = vld [vmem:[#allocation5 + $0x28] sm:$0xff]
    %v66 = vld [vmem:[#allocation5 + $0x30] sm:$0xff]
    %v67 = vld [vmem:[#allocation5 + $0x38] sm:$0xff]
    %v68 = vld [vmem:[#allocation5 + $0x40] sm:$0xff]
    %v69 = vld [vmem:[#allocation5 + $0x48] sm:$0xff]
    %v70 = vld [vmem:[#allocation5 + $0x50] sm:$0xff]
    %v71 = vld [vmem:[#allocation5 + $0x58] sm:$0xff]
    %v72 = vld [vmem:[#allocation5 + $0x60] sm:$0xff]
    %v73 = vld [vmem:[#allocation5 + $0x68] sm:$0xff]
    %v74 = vld [vmem:[#allocation5 + $0x70] sm:$0xff]
    %v75 = vld [vmem:[#allocation5 + $0x78] sm:$0xff]
    %v76 = vld [vmem:[#allocation5 + $0x80] sm:$0xff]
    %v77 = vld [vmem:[#allocation5 + $0x88] sm:$0xff]
    %v78 = vld [vmem:[#allocation5 + $0x90] sm:$0xff]
    %v79 = vld [vmem:[#allocation5 + $0x98] sm:$0xff]
    %v80 = vld [vmem:[#allocation5 + $0xa0] sm:$0xff]
    %v81 = vld [vmem:[#allocation5 + $0xa8] sm:$0xff]
    %v82 = vld [vmem:[#allocation5 + $0xb0] sm:$0xff]
    %v83 = vld [vmem:[#allocation5 + $0xb8] sm:$0xff]
    %v84 = vld [vmem:[#allocation5 + $0xc0] sm:$0xff]
    %v85 = vld [vmem:[#allocation5 + $0xc8] sm:$0xff]
    %v86 = vld [vmem:[#allocation5 + $0xd0] sm:$0xff]
    %v87 = vld [vmem:[#allocation5 + $0xd8] sm:$0xff]
    %v88 = vld [vmem:[#allocation5 + $0xe0] sm:$0xff]
    %v89 = vld [vmem:[#allocation5 + $0xe8] sm:$0xff]
    %v90 = vld [vmem:[#allocation5 + $0xf0] sm:$0xff]
    %v91 = vld [vmem:[#allocation5 + $0xf8] sm:$0xff]
    %v92 = vld [vmem:[#allocation5 + $0x100] sm:$0xff]
    %v93 = vld [vmem:[#allocation5 + $0x108] sm:$0xff]
    %v94 = vld [vmem:[#allocation5 + $0x110] sm:$0xff]
    %v95 = vld [vmem:[#allocation5 + $0x118] sm:$0xff]
    %v96 = vld [vmem:[#allocation5 + $0x120] sm:$0xff]
    %v97 = vld [vmem:[#allocation5 + $0x128] sm:$0xff]
    %v98 = vld [vmem:[#allocation5 + $0x130] sm:$0xff]
    %v99 = vld [vmem:[#allocation5 + $0x138] sm:$0xff]
    %v100 = vld [vmem:[#allocation5 + $0x140] sm:$0xff]
    %v101 = vld [vmem:[#allocation5 + $0x148] sm:$0xff]
    %v102 = vld [vmem:[#allocation5 + $0x150] sm:$0xff]
    %v103 = vld [vmem:[#allocation5 + $0x158] sm:$0xff]
    %v104 = vld [vmem:[#allocation5 + $0x160] sm:$0xff]
    %v105 = vld [vmem:[#allocation5 + $0x168] sm:$0xff]
    %v106 = vld [vmem:[#allocation5 + $0x170] sm:$0xff]
    %v107 = vld [vmem:[#allocation5 + $0x178] sm:$0xff]
    %v108 = vld [vmem:[#allocation5 + $0x180] sm:$0xff]
    %v109 = vld [vmem:[#allocation5 + $0x188] sm:$0xff]
    %v110 = vld [vmem:[#allocation5 + $0x190] sm:$0xff]
    %v111 = vld [vmem:[#allocation5 + $0x198] sm:$0xff]
    %v112 = vld [vmem:[#allocation5 + $0x1a0] sm:$0x3]
    %v113 = vld [vmem:[#allocation5 + $0x1a8] sm:$0x3]
    %v114 = vld [vmem:[#allocation7] sm:$0x3]
    %v116 = vperm.slane %v114, 0
    %v117 = vperm.slane %v114, 1
    %vm120 = vcmask 670720
    %v122 = vsel %vm120, %v59, 0
    %vm124 = vcmask 1041408
    %v126 = vsel %vm124, %v112, 0
    %v129 = vsel %vm124, %v113, 0
    %131 = vmatpush.msra.mxu0 %v90
    %132 = vmatpush.msra.mxu0 %v88
    %133 = vmatpush.msra.mxu0 %v86
    %134 = vmatpush.msra.mxu0 %v84
    %135 = vmatpush.msra.mxu0 %v82
    %136 = vmatpush.msra.mxu0 %v80
    %137 = vmatpush.msra.mxu0 %v78
    %138 = vmatpush.msra.mxu0 %v76
    %139 = vmatpush.msra.mxu0 %v74
    %140 = vmatpush.msra.mxu0 %v72
    %141 = vmatpush.msra.mxu0 %v70
    %142 = vmatpush.msra.mxu0 %v68
    %143 = vmatpush.msra.mxu0 %v66
    %144 = vmatpush.msra.mxu0 %v64
    %145 = vmatpush.msra.mxu0 %v62
    %146 = vmatpush.msra.mxu0 %v60
    %147 = vmatmul.f32.gmra.mxu0 %v58
    %v148 = vpop.f32.mrf.mxu0
    %v149 = vadd.f32 %v116, %v148
    %150 = vdwg.mxu0
    %151 = vmatpush.msra.mxu0 0.0
    %152 = vmatpush.msra.mxu0 0.0
    %153 = vmatpush.msra.mxu0 0.0
    %154 = vmatpush.msra.mxu0 0.0
    %155 = vmatpush.msra.mxu0 0.0
    %156 = vmatpush.msra.mxu0 %v126
    %157 = vmatpush.msra.mxu0 %v110
    %158 = vmatpush.msra.mxu0 %v108
    %159 = vmatpush.msra.mxu0 %v106
    %160 = vmatpush.msra.mxu0 %v104
    %161 = vmatpush.msra.mxu0 %v102
    %162 = vmatpush.msra.mxu0 %v100
    %163 = vmatpush.msra.mxu0 %v98
    %164 = vmatpush.msra.mxu0 %v96
    %165 = vmatpush.msra.mxu0 %v94
    %166 = vmatpush.msra.mxu0 %v92
    %167 = vmatmul.f32.gmra.mxu0 %v122
    %v168 = vpop.f32.mrf.mxu0
    %v169 = vadd.f32 %v149, %v168
    %170 = vdwg.mxu0
    %171 = vmatpush.msra.mxu0 %v91
    %172 = vmatpush.msra.mxu0 %v89
    %173 = vmatpush.msra.mxu0 %v87
    %174 = vmatpush.msra.mxu0 %v85
    %175 = vmatpush.msra.mxu0 %v83
    %176 = vmatpush.msra.mxu0 %v81
    %177 = vmatpush.msra.mxu0 %v79
    %178 = vmatpush.msra.mxu0 %v77
    %179 = vmatpush.msra.mxu0 %v75
    %180 = vmatpush.msra.mxu0 %v73
    %181 = vmatpush.msra.mxu0 %v71
    %182 = vmatpush.msra.mxu0 %v69
    %183 = vmatpush.msra.mxu0 %v67
    %184 = vmatpush.msra.mxu0 %v65
    %185 = vmatpush.msra.mxu0 %v63
    %186 = vmatpush.msra.mxu0 %v61
    %187 = vmatmul.f32.gmra.mxu0 %v58
    %v188 = vpop.f32.mrf.mxu0
    %v189 = vadd.f32 %v117, %v188
    %190 = vdwg.mxu0
    %191 = vmatpush.msra.mxu0 0.0
    %192 = vmatpush.msra.mxu0 0.0
    %193 = vmatpush.msra.mxu0 0.0
    %194 = vmatpush.msra.mxu0 0.0
    %195 = vmatpush.msra.mxu0 0.0
    %196 = vmatpush.msra.mxu0 %v129
    %197 = vmatpush.msra.mxu0 %v111
    %198 = vmatpush.msra.mxu0 %v109
    %199 = vmatpush.msra.mxu0 %v107
    %200 = vmatpush.msra.mxu0 %v105
    %201 = vmatpush.msra.mxu0 %v103
    %202 = vmatpush.msra.mxu0 %v101
    %203 = vmatpush.msra.mxu0 %v99
    %204 = vmatpush.msra.mxu0 %v97
    %205 = vmatpush.msra.mxu0 %v95
    %206 = vmatpush.msra.mxu0 %v93
    %207 = vmatmul.f32.gmra.mxu0 %v122
    %v208 = vpop.f32.mrf.mxu0
    %v209 = vadd.f32 %v189, %v208
    %210 = vdwg.mxu0
    %211 = vst [vmem:[#allocation8] sm:$0xff] %v169
    %vm212 = vcmask 998400
    %213 = vst.msk [vmem:[#allocation8 + $0x8] sm:$0xff] %vm212, %v209
    // Predicated region
    $region26: #{nnpolicy_forward.1} parent=1 // pred_check
      _
    $region27: #{nnpolicy_forward.1} parent=1 // pred_check_branch
      %215 = sbr.rel (0) target = $region29
    $region28: #{nnpolicy_forward.1} parent=1 // pred_region
      %217 = vsyncadd [#allocation4], 0
      %s219 = sshll.u32 [#allocation8], 4
      %s220 = int_to_ptr.vmem [resolvable:$true] %s219
      %s221 = sshll.u32 %s3, 4
      %s222 = int_to_ptr.hbm [resolvable:$true] %s221
      %224 = dma.vmem_to_hbm [thread:$0]  %s220, 256, %s222, [#allocation4]
    $region29: #{nnpolicy_forward.1} parent=1 // pred_fallthru
      _
    // Predicated region
    $region30: #{nnpolicy_forward.1} parent=1 // pred_check
      _
    $region31: #{nnpolicy_forward.1} parent=1 // pred_check_branch
      %226 = sbr.rel (0) target = $region33
    $region32: #{nnpolicy_forward.1} parent=1 // pred_region
      %228 = dma.done [#allocation4], 256
    $region33: #{nnpolicy_forward.1} parent=1 // pred_fallthru
      _
    %229 = vsyncpa [#allocation3], 1
    %230 = vsyncpa [#allocation6], 1
    %231 = vsyncpa [#allocation4], 1

</llo_original>
